<compile_context>
chip_gen: v7x
topology: tpu7x:2x2x1
jax: 0.10.0
libtpu: 0.0.40
codegen_flags: <defaults>
</compile_context>

<pallas_src>
import functools

import jax
import jax.numpy as jnp
from jax import lax
from jax.experimental import pallas as pl
from jax.experimental.pallas import tpu as pltpu

BN_EPS = 1e-5
L2_EPS_SQ = 1e-24  # == (1e-12)**2 : F.normalize clamp applied to the squared norm


# ----------------------------- compiler params ------------------------------


def _vmem_limit_bytes():
    """Explicit scoped-VMEM limit: ~100 MiB on v5e/v6e, ~48 MiB on v7x."""
    try:
        cap = int(pltpu.get_tpu_info().vmem_capacity_bytes)
    except Exception:  # pragma: no cover - conservative fallback
        cap = 64 << 20
    return int(max(min(cap - (16 << 20), 100 << 20), 32 << 20))


_COMPILER_PARAMS = pltpu.CompilerParams(
    dimension_semantics=("parallel",),
    vmem_limit_bytes=_vmem_limit_bytes(),
)


def _resident_spec(shape):
    """BlockSpec for a grid-invariant (resident) operand; single-buffered."""
    idx = lambda i: (0,) * len(shape)
    try:
        return pl.BlockSpec(shape, idx, pipeline_mode=pl.Buffered(1))
    except TypeError:  # older BlockSpec signature without pipeline_mode
        return pl.BlockSpec(shape, idx)


# ----------------------------- kernels --------------------------------------


def _lin_relu_stats_kernel(x_ref, w_ref, b_ref, h_ref, stats_ref):
    """h = relu(x @ W + b) stored in bf16; emit per-tile (sum, sum_sq) over batch.

    Stats are computed on the bf16-rounded activations (what the next layer
    actually consumes), accumulated in f32.
    """
    x = x_ref[...].astype(jnp.bfloat16)                       # no-op if already bf16
    h = jnp.dot(x, w_ref[...], preferred_element_type=jnp.float32) + b_ref[...]
    h = jnp.maximum(h, 0.0)
    h_bf = h.astype(jnp.bfloat16)
    h_ref[...] = h_bf                                          # bf16 intermediate -> HBM
    hf = h_bf.astype(jnp.float32)
    # Two direct row stores into the (1, 2, H) stats block (no concat relayout).
    stats_ref[0, 0:1, :] = jnp.sum(hf, axis=0, keepdims=True)
    stats_ref[0, 1:2, :] = jnp.sum(hf * hf, axis=0, keepdims=True)


def _lin_relu_l2_kernel(h_ref, w_ref, b_ref, o_ref):
    """y = relu(h @ W + b); out = y / max(||y||_2, 1e-12)  (row-wise)."""
    h = h_ref[...].astype(jnp.bfloat16)
    y = jnp.dot(h, w_ref[...], preferred_element_type=jnp.float32) + b_ref[...]
    y = jnp.maximum(y, 0.0)
    sumsq = jnp.sum(y * y, axis=1, keepdims=True)              # lane reduce (XLU)
    o_ref[...] = (y * lax.rsqrt(jnp.maximum(sumsq, L2_EPS_SQ))).astype(o_ref.dtype)


# ----------------------------- wrappers --------------------------------------


def _lin_relu_stats(x, w, b, bt):
    """One Linear+ReLU layer with per-tile batch statistics output."""
    B, din = x.shape
    H = w.shape[1]
    nt = B // bt
    return pl.pallas_call(
        _lin_relu_stats_kernel,
        out_shape=(jax.ShapeDtypeStruct((B, H), jnp.bfloat16),
                   jax.ShapeDtypeStruct((nt, 2, H), jnp.float32)),
        grid=(nt,),
        in_specs=[pl.BlockSpec((bt, din), lambda i: (i, 0)),
                  _resident_spec((din, H)),     # resident bf16 weight
                  _resident_spec((1, H))],      # resident f32 bias
        out_specs=(pl.BlockSpec((bt, H), lambda i: (i, 0)),
                   pl.BlockSpec((1, 2, H), lambda i: (i, 0, 0))),
        compiler_params=_COMPILER_PARAMS,
    )(x, w, b)


def _lin_relu_l2(h, w, b, bt):
    """Final Linear+ReLU followed by row-wise L2 normalization."""
    B, hin = h.shape
    dout = w.shape[1]
    nt = B // bt
    return pl.pallas_call(
        _lin_relu_l2_kernel,
        out_shape=jax.ShapeDtypeStruct((B, dout), jnp.float32),
        grid=(nt,),
        in_specs=[pl.BlockSpec((bt, hin), lambda i: (i, 0)),
                  _resident_spec((hin, dout)),
                  _resident_spec((1, dout))],
        out_specs=pl.BlockSpec((bt, dout), lambda i: (i, 0)),
        compiler_params=_COMPILER_PARAMS,
    )(h, w, b)


def _fold_bn_into_next(stats, gamma, beta, batch, w_next, b_next):
    """Reduce per-tile (sum, sum_sq) and fold BN into the next layer's W/b.

    y = (h*scale + shift) @ W + b == h @ (diag(scale) @ W) + (shift @ W + b)
    Fold is done in f32; the folded weight is cast back to bf16 for the MXU.
    """
    s = jnp.sum(stats[:, 0, :], axis=0)
    s2 = jnp.sum(stats[:, 1, :], axis=0)
    mu = s / batch
    # One-pass biased variance, clamped >= 0 (post-ReLU values are moderate;
    # cancellation is bounded by the clamp).
    var = jnp.maximum(s2 / batch - mu * mu, 0.0)
    scale = gamma[0] * lax.rsqrt(var + BN_EPS)                 # (hin,)
    shift = beta[0] - mu * scale                               # (hin,)
    w_f32 = w_next.astype(jnp.float32)
    w_folded = (scale[:, None] * w_f32).astype(jnp.bfloat16)   # row-scaled weight
    b_folded = (shift @ w_f32 + b_next).astype(jnp.float32)    # (1, hout)
    return w_folded, b_folded


def _pick_batch_tile(B, requested=None):
    """Largest valid tile <= requested that divides B and respects sublane tiling."""
    bt = requested if requested is not None else min(B, 512)
    bt = max(1, min(bt, B))
    if bt == B:
        return B
    # bf16 intermediates pack 16 rows per sublane tile -> prefer multiples of 16.
    if B % 16 == 0:
        step = 16
    elif B % 8 == 0:
        step = 8
    else:
        return B  # awkward batch: single full-batch tile (block == full dim is legal)
    bt = max(step, (bt // step) * step)
    while B % bt != 0:
        bt -= step
    return bt


@functools.partial(jax.jit, static_argnames=("batch_tile",))
def decoder_forward(z, params, batch_tile=None):
    (w1, b1, g1, be1, w2, b2, g2, be2, w3, b3) = params
    B = z.shape[0]
    bt = _pick_batch_tile(B, batch_tile)

    h1, st1 = _lin_relu_stats(z, w1, b1, bt)
    w2f, b2f = _fold_bn_into_next(st1, g1, be1, B, w2, b2)
    h2, st2 = _lin_relu_stats(h1, w2f, b2f, bt)
    w3f, b3f = _fold_bn_into_next(st2, g2, be2, B, w3, b3)

    # Final layer's output block is narrow (dout=128) -> a larger batch tile is
    # cheap and amortizes grid-step overhead / MXU fill.
    bt3 = _pick_batch_tile(B, min(B, bt * 4))
    return _lin_relu_l2(h2, w3f, b3f, bt3)


# ----------------------------- params / references ---------------------------


def init_params(key, n_components, hidden, out_dim=128):
    """Deterministic synthetic parameters. Linear weights stored (in, out), bf16."""
    ks = jax.random.split(key, 7)

    def lin(kk, fan_in, fan_out):
        bound = 1.0 / jnp.sqrt(fan_in)
        kw, kb = jax.random.split(kk)
        w = jax.random.uniform(kw, (fan_in, fan_out), jnp.float32, -bound, bound)
        b = jax.random.uniform(kb, (1, fan_out), jnp.float32, -bound, bound)
        return w.astype(jnp.bfloat16), b   # bf16 weights (MXU-native), f32 bias

    w1, b1 = lin(ks[0], n_components, hidden)
    w2, b2 = lin(ks[1], hidden, hidden)
    w3, b3 = lin(ks[2], hidden, out_dim)

    g1 = 1.0 + 0.01 * jax.random.normal(ks[3], (1, hidden), jnp.float32)
    be1 = 0.01 * jax.random.normal(ks[4], (1, hidden), jnp.float32)
    g2 = 1.0 + 0.01 * jax.random.normal(ks[5], (1, hidden), jnp.float32)
    be2 = 0.01 * jax.random.normal(ks[6], (1, hidden), jnp.float32)

    return (w1, b1, g1, be1, w2, b2, g2, be2, w3, b3)


def reference_forward_matched(z, params):
    """Pure-JAX reference replicating the kernel's bf16/f32 math and BN folding."""
    (w1, b1, g1, be1, w2, b2, g2, be2, w3, b3) = params

    def lin_relu(x, w, b):
        y = jnp.dot(x.astype(jnp.bfloat16), w,
                    preferred_element_type=jnp.float32) + b
        return jnp.maximum(y, 0.0)

    def fold(h_bf16, gamma, beta, w_next, b_next):
        hf = h_bf16.astype(jnp.float32)
        mu = jnp.mean(hf, axis=0)
        var = jnp.maximum(jnp.mean(hf * hf, axis=0) - mu * mu, 0.0)
        scale = gamma[0] * lax.rsqrt(var + BN_EPS)
        shift = beta[0] - mu * scale
        wf = w_next.astype(jnp.float32)
        return (scale[:, None] * wf).astype(jnp.bfloat16), shift @ wf + b_next

    h1 = lin_relu(z, w1, b1).astype(jnp.bfloat16)
    w2f, b2f = fold(h1, g1, be1, w2, b2)
    h2 = lin_relu(h1, w2f, b2f).astype(jnp.bfloat16)
    w3f, b3f = fold(h2, g2, be2, w3, b3)
    y = lin_relu(h2, w3f, b3f)
    return y * lax.rsqrt(jnp.maximum(jnp.sum(y * y, axis=1, keepdims=True), L2_EPS_SQ))


def reference_forward_f32(z, params):
    """Full-f32 spec reference (BatchNorm1d training-mode forward + F.normalize)."""
    (w1, b1, g1, be1, w2, b2, g2, be2, w3, b3) = params
    w1, w2, w3 = (w.astype(jnp.float32) for w in (w1, w2, w3))

    def bn(x, g, b):
        mu = jnp.mean(x, axis=0, keepdims=True)
        var = jnp.mean((x - mu) ** 2, axis=0, keepdims=True)
        return g * (x - mu) / jnp.sqrt(var + BN_EPS) + b

    h = jnp.maximum(z @ w1 + b1, 0.0)
    h = bn(h, g1, be1)
    h = jnp.maximum(h @ w2 + b2, 0.0)
    h = bn(h, g2, be2)
    h = jnp.maximum(h @ w3 + b3, 0.0)
    norm = jnp.sqrt(jnp.sum(h * h, axis=1, keepdims=True))
    return h / jnp.maximum(norm, 1e-12)


# ----------------------------- main ------------------------------------------


if __name__ == "__main__":
    key = jax.random.PRNGKey(0)
    k_param, k_z = jax.random.split(key)

    B = 32              # batch (two batch tiles of 16 -> exercises the grid)
    n_components = 128  # latent dim, lane-dense
    hidden = 128        # hidden width (scaled down from 1024, kept lane-dense)

    params = init_params(k_param, n_components, hidden)
    z = jax.random.normal(k_z, (B, n_components), jnp.float32)

    out = decoder_forward(z, params, batch_tile=16)
    out = jax.block_until_ready(out)
    assert out.shape == (B, 128)

    ref_matched = reference_forward_matched(z, params)
    ref_f32 = reference_forward_f32(z, params)

    max_diff_matched = float(jnp.max(jnp.abs(out - ref_matched)))
    max_diff_f32 = float(jnp.max(jnp.abs(out - ref_f32)))
    assert jnp.allclose(out, ref_matched, atol=5e-3, rtol=5e-3), (
        "mismatch vs bf16-matched reference: %e" % max_diff_matched)
    assert max_diff_f32 < 1e-1, "mismatch vs f32 spec reference: %e" % max_diff_f32

    # TODO(synk): nn.BatchNorm1d running_mean/running_var buffer updates are not
    # modeled; forward uses training-mode batch statistics (matches module default).
    print("KERNEL_OK")
</pallas_src>

<mosaic_0001>
module attributes {stable_mosaic.version = 11 : i64} {
  func.func @_lin_relu_stats_kernel(%arg0: i32, %arg1: memref<16x128xf32, #tpu.memory_space<vmem>>, %arg2: memref<128x128xbf16, #tpu.memory_space<vmem>>, %arg3: memref<1x128xf32, #tpu.memory_space<vmem>>, %arg4: memref<16x128xbf16, #tpu.memory_space<vmem>>, %arg5: memref<1x2x128xf32, #tpu.memory_space<vmem>>) attributes {dimension_semantics = [#tpu.dimension_semantics<parallel>], iteration_bounds = array<i64: 2>, scalar_prefetch = 0 : i64, scratch_operands = 0 : i64, tpu.core_type = #tpu.core_type<tc>, window_params = [{transform_indices = @transform_0, window_bounds = array<i64: 16, 128>}, {pipeline_mode = #tpu.pipeline_mode<synchronous>, transform_indices = @transform_1, window_bounds = array<i64: 128, 128>}, {pipeline_mode = #tpu.pipeline_mode<synchronous>, transform_indices = @transform_2, window_bounds = array<i64: 1, 128>}, {transform_indices = @transform_3, window_bounds = array<i64: 16, 128>}, {transform_indices = @transform_4, window_bounds = array<i64: 1, 2, 128>}]} {
    %c0 = arith.constant 0 : index
    %c0_0 = arith.constant 0 : index
    %0 = vector.load %arg1[%c0, %c0_0] : memref<16x128xf32, #tpu.memory_space<vmem>>, vector<16x128xf32>
    %1 = arith.truncf %0 : vector<16x128xf32> to vector<16x128xbf16>
    %c0_1 = arith.constant 0 : index
    %c0_2 = arith.constant 0 : index
    %2 = vector.load %arg2[%c0_1, %c0_2] : memref<128x128xbf16, #tpu.memory_space<vmem>>, vector<128x128xbf16>
    %cst = arith.constant dense<0.000000e+00> : vector<16x128xf32>
    %3 = tpu.matmul %1, %2, %cst {dimension_numbers = #tpu.dot_dimension_numbers<[1], [0], [0], [1], [0, 0, 1, 1], [], []>} : vector<16x128xbf16>, vector<128x128xbf16>, vector<16x128xf32> -> vector<16x128xf32>
    %c0_3 = arith.constant 0 : index
    %c0_4 = arith.constant 0 : index
    %4 = vector.load %arg3[%c0_3, %c0_4] : memref<1x128xf32, #tpu.memory_space<vmem>>, vector<1x128xf32>
    %5 = vector.broadcast %4 : vector<1x128xf32> to vector<16x128xf32>
    %6 = arith.addf %3, %5 : vector<16x128xf32>
    %cst_5 = arith.constant 0.000000e+00 : f32
    %7 = vector.broadcast %cst_5 : f32 to vector<16x128xf32>
    %8 = arith.maximumf %6, %7 : vector<16x128xf32>
    %9 = arith.truncf %8 : vector<16x128xf32> to vector<16x128xbf16>
    %c0_6 = arith.constant 0 : index
    %c0_7 = arith.constant 0 : index
    %10 = vector.load %arg4[%c0_6, %c0_7] : memref<16x128xbf16, #tpu.memory_space<vmem>>, vector<16x128xbf16>
    tpu.vector_store %arg4[%c0_6, %c0_7], %9 {strides = array<i32>} : memref<16x128xbf16, #tpu.memory_space<vmem>>, vector<16x128xbf16>,
    %11 = arith.extf %9 : vector<16x128xbf16> to vector<16x128xf32>
    %cst_8 = arith.constant dense<0.000000e+00> : vector<128xf32>
    %12 = vector.multi_reduction <add>, %11, %cst_8 [0] : vector<16x128xf32> to vector<128xf32>
    %13 = vector.shape_cast %12 : vector<128xf32> to vector<1x128xf32>
    %c0_9 = arith.constant 0 : index
    %c0_10 = arith.constant 0 : index
    %c0_11 = arith.constant 0 : index
    %14 = vector.load %arg5[%c0_9, %c0_10, %c0_11] : memref<1x2x128xf32, #tpu.memory_space<vmem>>, vector<1x1x128xf32>
    %15 = vector.shape_cast %14 : vector<1x1x128xf32> to vector<1x128xf32>
    %16 = vector.shape_cast %13 : vector<1x128xf32> to vector<1x1x128xf32>
    tpu.vector_store %arg5[%c0_9, %c0_10, %c0_11], %16 {strides = array<i32>} : memref<1x2x128xf32, #tpu.memory_space<vmem>>, vector<1x1x128xf32>,
    %17 = arith.mulf %11, %11 : vector<16x128xf32>
    %cst_12 = arith.constant dense<0.000000e+00> : vector<128xf32>
    %18 = vector.multi_reduction <add>, %17, %cst_12 [0] : vector<16x128xf32> to vector<128xf32>
    %19 = vector.shape_cast %18 : vector<128xf32> to vector<1x128xf32>
    %c0_13 = arith.constant 0 : index
    %c1 = arith.constant 1 : index
    %c0_14 = arith.constant 0 : index
    %20 = vector.load %arg5[%c0_13, %c1, %c0_14] : memref<1x2x128xf32, #tpu.memory_space<vmem>>, vector<1x1x128xf32>
    %21 = vector.shape_cast %20 : vector<1x1x128xf32> to vector<1x128xf32>
    %22 = vector.shape_cast %19 : vector<1x128xf32> to vector<1x1x128xf32>
    tpu.vector_store %arg5[%c0_13, %c1, %c0_14], %22 {strides = array<i32>} : memref<1x2x128xf32, #tpu.memory_space<vmem>>, vector<1x1x128xf32>,
    return
  }
  func.func @transform_0(%arg0: i32) -> (i32, i32) {
    %c0_i32 = arith.constant 0 : i32
    %c0_i32_0 = arith.constant 0 : i32
    return %arg0, %c0_i32 : i32, i32
  }
  func.func @transform_1(%arg0: i32) -> (i32, i32) {
    %c0_i32 = arith.constant 0 : i32
    %c0_i32_0 = arith.constant 0 : i32
    %c0_i32_1 = arith.constant 0 : i32
    return %c0_i32, %c0_i32_0 : i32, i32
  }
  func.func @transform_2(%arg0: i32) -> (i32, i32) {
    %c0_i32 = arith.constant 0 : i32
    %c0_i32_0 = arith.constant 0 : i32
    %c0_i32_1 = arith.constant 0 : i32
    return %c0_i32, %c0_i32_0 : i32, i32
  }
  func.func @transform_3(%arg0: i32) -> (i32, i32) {
    %c0_i32 = arith.constant 0 : i32
    %c0_i32_0 = arith.constant 0 : i32
    return %arg0, %c0_i32 : i32, i32
  }
  func.func @transform_4(%arg0: i32) -> (i32, i32, i32) {
    %c0_i32 = arith.constant 0 : i32
    %c0_i32_0 = arith.constant 0 : i32
    %c0_i32_1 = arith.constant 0 : i32
    return %arg0, %c0_i32, %c0_i32_0 : i32, i32, i32
  }
}

module attributes {stable_mosaic.version = 11 : i64} {
  func.func @_lin_relu_stats_kernel(%arg0: i32, %arg1: memref<16x128xbf16, #tpu.memory_space<vmem>>, %arg2: memref<128x128xbf16, #tpu.memory_space<vmem>>, %arg3: memref<1x128xf32, #tpu.memory_space<vmem>>, %arg4: memref<16x128xbf16, #tpu.memory_space<vmem>>, %arg5: memref<1x2x128xf32, #tpu.memory_space<vmem>>) attributes {dimension_semantics = [#tpu.dimension_semantics<parallel>], iteration_bounds = array<i64: 2>, scalar_prefetch = 0 : i64, scratch_operands = 0 : i64, tpu.core_type = #tpu.core_type<tc>, window_params = [{transform_indices = @transform_0, window_bounds = array<i64: 16, 128>}, {pipeline_mode = #tpu.pipeline_mode<synchronous>, transform_indices = @transform_1, window_bounds = array<i64: 128, 128>}, {pipeline_mode = #tpu.pipeline_mode<synchronous>, transform_indices = @transform_2, window_bounds = array<i64: 1, 128>}, {transform_indices = @transform_3, window_bounds = array<i64: 16, 128>}, {transform_indices = @transform_4, window_bounds = array<i64: 1, 2, 128>}]} {
    %c0 = arith.constant 0 : index
    %c0_0 = arith.constant 0 : index
    %0 = vector.load %arg1[%c0, %c0_0] : memref<16x128xbf16, #tpu.memory_space<vmem>>, vector<16x128xbf16>
    %c0_1 = arith.constant 0 : index
    %c0_2 = arith.constant 0 : index
    %1 = vector.load %arg2[%c0_1, %c0_2] : memref<128x128xbf16, #tpu.memory_space<vmem>>, vector<128x128xbf16>
    %cst = arith.constant dense<0.000000e+00> : vector<16x128xf32>
    %2 = tpu.matmul %0, %1, %cst {dimension_numbers = #tpu.dot_dimension_numbers<[1], [0], [0], [1], [0, 0, 1, 1], [], []>} : vector<16x128xbf16>, vector<128x128xbf16>, vector<16x128xf32> -> vector<16x128xf32>
    %c0_3 = arith.constant 0 : index
    %c0_4 = arith.constant 0 : index
    %3 = vector.load %arg3[%c0_3, %c0_4] : memref<1x128xf32, #tpu.memory_space<vmem>>, vector<1x128xf32>
    %4 = vector.broadcast %3 : vector<1x128xf32> to vector<16x128xf32>
    %5 = arith.addf %2, %4 : vector<16x128xf32>
    %cst_5 = arith.constant 0.000000e+00 : f32
    %6 = vector.broadcast %cst_5 : f32 to vector<16x128xf32>
    %7 = arith.maximumf %5, %6 : vector<16x128xf32>
    %8 = arith.truncf %7 : vector<16x128xf32> to vector<16x128xbf16>
    %c0_6 = arith.constant 0 : index
    %c0_7 = arith.constant 0 : index
    %9 = vector.load %arg4[%c0_6, %c0_7] : memref<16x128xbf16, #tpu.memory_space<vmem>>, vector<16x128xbf16>
    tpu.vector_store %arg4[%c0_6, %c0_7], %8 {strides = array<i32>} : memref<16x128xbf16, #tpu.memory_space<vmem>>, vector<16x128xbf16>,
    %10 = arith.extf %8 : vector<16x128xbf16> to vector<16x128xf32>
    %cst_8 = arith.constant dense<0.000000e+00> : vector<128xf32>
    %11 = vector.multi_reduction <add>, %10, %cst_8 [0] : vector<16x128xf32> to vector<128xf32>
    %12 = vector.shape_cast %11 : vector<128xf32> to vector<1x128xf32>
    %c0_9 = arith.constant 0 : index
    %c0_10 = arith.constant 0 : index
    %c0_11 = arith.constant 0 : index
    %13 = vector.load %arg5[%c0_9, %c0_10, %c0_11] : memref<1x2x128xf32, #tpu.memory_space<vmem>>, vector<1x1x128xf32>
    %14 = vector.shape_cast %13 : vector<1x1x128xf32> to vector<1x128xf32>
    %15 = vector.shape_cast %12 : vector<1x128xf32> to vector<1x1x128xf32>
    tpu.vector_store %arg5[%c0_9, %c0_10, %c0_11], %15 {strides = array<i32>} : memref<1x2x128xf32, #tpu.memory_space<vmem>>, vector<1x1x128xf32>,
    %16 = arith.mulf %10, %10 : vector<16x128xf32>
    %cst_12 = arith.constant dense<0.000000e+00> : vector<128xf32>
    %17 = vector.multi_reduction <add>, %16, %cst_12 [0] : vector<16x128xf32> to vector<128xf32>
    %18 = vector.shape_cast %17 : vector<128xf32> to vector<1x128xf32>
    %c0_13 = arith.constant 0 : index
    %c1 = arith.constant 1 : index
    %c0_14 = arith.constant 0 : index
    %19 = vector.load %arg5[%c0_13, %c1, %c0_14] : memref<1x2x128xf32, #tpu.memory_space<vmem>>, vector<1x1x128xf32>
    %20 = vector.shape_cast %19 : vector<1x1x128xf32> to vector<1x128xf32>
    %21 = vector.shape_cast %18 : vector<1x128xf32> to vector<1x1x128xf32>
    tpu.vector_store %arg5[%c0_13, %c1, %c0_14], %21 {strides = array<i32>} : memref<1x2x128xf32, #tpu.memory_space<vmem>>, vector<1x1x128xf32>,
    return
  }
  func.func @transform_0(%arg0: i32) -> (i32, i32) {
    %c0_i32 = arith.constant 0 : i32
    %c0_i32_0 = arith.constant 0 : i32
    return %arg0, %c0_i32 : i32, i32
  }
  func.func @transform_1(%arg0: i32) -> (i32, i32) {
    %c0_i32 = arith.constant 0 : i32
    %c0_i32_0 = arith.constant 0 : i32
    %c0_i32_1 = arith.constant 0 : i32
    return %c0_i32, %c0_i32_0 : i32, i32
  }
  func.func @transform_2(%arg0: i32) -> (i32, i32) {
    %c0_i32 = arith.constant 0 : i32
    %c0_i32_0 = arith.constant 0 : i32
    %c0_i32_1 = arith.constant 0 : i32
    return %c0_i32, %c0_i32_0 : i32, i32
  }
  func.func @transform_3(%arg0: i32) -> (i32, i32) {
    %c0_i32 = arith.constant 0 : i32
    %c0_i32_0 = arith.constant 0 : i32
    return %arg0, %c0_i32 : i32, i32
  }
  func.func @transform_4(%arg0: i32) -> (i32, i32, i32) {
    %c0_i32 = arith.constant 0 : i32
    %c0_i32_0 = arith.constant 0 : i32
    %c0_i32_1 = arith.constant 0 : i32
    return %arg0, %c0_i32, %c0_i32_0 : i32, i32, i32
  }
}

module attributes {stable_mosaic.version = 11 : i64} {
  func.func @_lin_relu_l2_kernel(%arg0: i32, %arg1: memref<32x128xbf16, #tpu.memory_space<vmem>>, %arg2: memref<128x128xbf16, #tpu.memory_space<vmem>>, %arg3: memref<1x128xf32, #tpu.memory_space<vmem>>, %arg4: memref<32x128xf32, #tpu.memory_space<vmem>>) attributes {dimension_semantics = [#tpu.dimension_semantics<parallel>], iteration_bounds = array<i64: 1>, scalar_prefetch = 0 : i64, scratch_operands = 0 : i64, tpu.core_type = #tpu.core_type<tc>, window_params = [{transform_indices = @transform_0, window_bounds = array<i64: 32, 128>}, {pipeline_mode = #tpu.pipeline_mode<synchronous>, transform_indices = @transform_1, window_bounds = array<i64: 128, 128>}, {pipeline_mode = #tpu.pipeline_mode<synchronous>, transform_indices = @transform_2, window_bounds = array<i64: 1, 128>}, {transform_indices = @transform_3, window_bounds = array<i64: 32, 128>}]} {
    %c0 = arith.constant 0 : index
    %c0_0 = arith.constant 0 : index
    %0 = vector.load %arg1[%c0, %c0_0] : memref<32x128xbf16, #tpu.memory_space<vmem>>, vector<32x128xbf16>
    %c0_1 = arith.constant 0 : index
    %c0_2 = arith.constant 0 : index
    %1 = vector.load %arg2[%c0_1, %c0_2] : memref<128x128xbf16, #tpu.memory_space<vmem>>, vector<128x128xbf16>
    %cst = arith.constant dense<0.000000e+00> : vector<32x128xf32>
    %2 = tpu.matmul %0, %1, %cst {dimension_numbers = #tpu.dot_dimension_numbers<[1], [0], [0], [1], [0, 0, 1, 1], [], []>} : vector<32x128xbf16>, vector<128x128xbf16>, vector<32x128xf32> -> vector<32x128xf32>
    %c0_3 = arith.constant 0 : index
    %c0_4 = arith.constant 0 : index
    %3 = vector.load %arg3[%c0_3, %c0_4] : memref<1x128xf32, #tpu.memory_space<vmem>>, vector<1x128xf32>
    %4 = vector.broadcast %3 : vector<1x128xf32> to vector<32x128xf32>
    %5 = arith.addf %2, %4 : vector<32x128xf32>
    %cst_5 = arith.constant 0.000000e+00 : f32
    %6 = vector.broadcast %cst_5 : f32 to vector<32x128xf32>
    %7 = arith.maximumf %5, %6 : vector<32x128xf32>
    %8 = arith.mulf %7, %7 : vector<32x128xf32>
    %cst_6 = arith.constant dense<0.000000e+00> : vector<32xf32>
    %9 = vector.multi_reduction <add>, %8, %cst_6 [1] : vector<32x128xf32> to vector<32xf32>
    %10 = vector.shape_cast %9 : vector<32xf32> to vector<32x1xf32>
    %cst_7 = arith.constant 1.000000e-24 : f32
    %11 = vector.broadcast %cst_7 : f32 to vector<32x1xf32>
    %12 = arith.maximumf %10, %11 : vector<32x1xf32>
    %13 = math.rsqrt %12 : vector<32x1xf32>
    %14 = vector.broadcast %13 : vector<32x1xf32> to vector<32x128xf32>
    %15 = arith.mulf %7, %14 : vector<32x128xf32>
    %c0_8 = arith.constant 0 : index
    %c0_9 = arith.constant 0 : index
    %16 = vector.load %arg4[%c0_8, %c0_9] : memref<32x128xf32, #tpu.memory_space<vmem>>, vector<32x128xf32>
    tpu.vector_store %arg4[%c0_8, %c0_9], %15 {strides = array<i32>} : memref<32x128xf32, #tpu.memory_space<vmem>>, vector<32x128xf32>,
    return
  }
  func.func @transform_0(%arg0: i32) -> (i32, i32) {
    %c0_i32 = arith.constant 0 : i32
    %c0_i32_0 = arith.constant 0 : i32
    return %arg0, %c0_i32 : i32, i32
  }
  func.func @transform_1(%arg0: i32) -> (i32, i32) {
    %c0_i32 = arith.constant 0 : i32
    %c0_i32_0 = arith.constant 0 : i32
    %c0_i32_1 = arith.constant 0 : i32
    return %c0_i32, %c0_i32_0 : i32, i32
  }
  func.func @transform_2(%arg0: i32) -> (i32, i32) {
    %c0_i32 = arith.constant 0 : i32
    %c0_i32_0 = arith.constant 0 : i32
    %c0_i32_1 = arith.constant 0 : i32
    return %c0_i32, %c0_i32_0 : i32, i32
  }
  func.func @transform_3(%arg0: i32) -> (i32, i32) {
    %c0_i32 = arith.constant 0 : i32
    %c0_i32_0 = arith.constant 0 : i32
    return %arg0, %c0_i32 : i32, i32
  }
}

</mosaic_0001>

<llo_original>
// kernel: decoder_forward.3
$region0: #{decoder_forward.3}
  #allocation0 [shape = 'u32[]', space=smem, size = 0x4, offset = 0x4, fixed_abs, tag = 'smem constant byte address 0x4 - core index']
  #allocation1 [shape = 'u32[144,128]{1,0:T(1,128)}', space=vmem, size = 0x12000, scoped, tag = 'internal scratch']
  %s0 = inlined_call_operand.hbm [shape: f32[32,128], index: 0, kind: input, shape index: {}]
  %s1 = inlined_call_operand.hbm [shape: bf16[128,128], index: 1, kind: input, shape index: {}]
  %s2 = inlined_call_operand.vmem [shape: f32[1,128], index: 2, kind: input, shape index: {}]
  %s3 = inlined_call_operand.vmem [shape: bf16[32,128], index: 3, kind: output, shape index: {0}]
  %s4 = inlined_call_operand.vmem [shape: f32[2,2,128], index: 4, kind: output, shape index: {1}]
  %5 = xla_tuple %s3, %s4
  %s6 = sld [smem:[#allocation0]]
  $region61: #{decoder_forward.3} parent=0
    _
  %s8 = ssub.s32 1, %s6
  %s9 = scalar_select 0, %s8, %s6
  $region1: #{decoder_forward.3} parent=0
    #allocation2 [shape = 'u8[16384]{0}', space=vmem, size = 0x4000, scoped, tag = 'input window, operand 0']
    #allocation3 [shape = 's32[2]{0}', space=sflag, size = 0x8, scoped, tag = 'scoped memory for decoder_forward.3']
    #allocation4 [shape = 'u8[32768]{0}', space=vmem, size = 0x8000, scoped, tag = 'input window, operand 1, single buffered']
    #allocation5 [shape = 's32[1]{0}', space=sflag, size = 0x4, scoped, tag = 'scoped memory for decoder_forward.3']
    %10 = vsyncpa [#allocation3], 0
    %s11 = scalar_lea.sflag [#allocation3], 1
    %12 = vsyncpa %s11, 0
    %13 = vsyncpa [#allocation5], 0
    loop: start=0, step=1, limit=4
    $region2: #{decoder_forward.3} parent=1 // loop_pre_header
      _
    $region3: #{decoder_forward.3} parent=1 // loop_header
      %s15 = sphi 0, %s19
      %p16 = scmp.ge.s32.totalorder %s15, 4
      %s25 = sphi 0, %s27
      %s28 = sphi 0, %s25
      %s29 = sphi 0, %s28
      %s45 = sphi 0, %s29
      %s49 = sphi 0, %s49
      %s51 = sphi 0, %s49
      %s52 = sphi 0, %s51
      %s66 = sphi 0, %s52
      %s70 = sphi 0, %s70
      %s72 = sphi 0, %s70
      %s73 = sphi 0, %s72
      %s87 = sphi 0, %s73
      %s93 = sphi 0, %s95
      %s96 = sphi 0, %s93
      %s97 = sphi 0, %s96
      %s113 = sphi 0, %s97
      %s119 = sphi 0, %s121
      %s122 = sphi 0, %s119
      %s123 = sphi 0, %s122
      %s139 = sphi 0, %s123
    $region4: #{decoder_forward.3} parent=1 // loop_header_branch
      %18 = sbr.rel (%p16) target = $region8
    $region5: #{decoder_forward.3} parent=1 // loop_body
      %s20 = ssub.s32 %s15, 1
      %s21 = ssub.s32 %s15, 2
      %s22 = sadd.s32 %s15, 1
      %s23 = ssub.s32 %s15, %s22
      %p24 = scmp.eq.s32.totalorder %s23, 0
      %s26 = sadd.s32 %s25, 1
      %s27 = scalar_select %p24, %s25, %s26
      %p30 = pneg %p24
      %p31 = scmp.eq.s32.totalorder %s15, 1
      %p32 = por %p30, %p31
      %p33 = scmp.ne.s32.totalorder %s25, %s28
      %p34 = scmp.eq.s32.totalorder %s15, 0
      %p35 = por %p33, %p34
      %p36 = scmp.ne.s32.totalorder %s25, %s28
      %p37 = scmp.eq.s32.totalorder %s20, 1
      %p38 = por %p36, %p37
      %p39 = scmp.ne.s32.totalorder %s28, %s29
      %p40 = scmp.eq.s32.totalorder %s20, 0
      %p41 = por %p39, %p40
      %p42 = scmp.ne.s32.totalorder %s28, %s29
      %p43 = scmp.eq.s32.totalorder %s21, 1
      %p44 = por %p42, %p43
      %p46 = scmp.ne.s32.totalorder %s29, %s45
      %p47 = scmp.eq.s32.totalorder %s21, 0
      %p48 = por %p46, %p47
      %s50 = sadd.s32 %s49, 1
      %p53 = scmp.eq.s32.totalorder %s15, 1
      %p54 = scmp.ne.s32.totalorder %s49, %s51
      %p55 = scmp.eq.s32.totalorder %s15, 0
      %p56 = por %p54, %p55
      %p57 = scmp.ne.s32.totalorder %s49, %s51
      %p58 = scmp.eq.s32.totalorder %s20, 1
      %p59 = por %p57, %p58
      %p60 = scmp.ne.s32.totalorder %s51, %s52
      %p61 = scmp.eq.s32.totalorder %s20, 0
      %p62 = por %p60, %p61
      %p63 = scmp.ne.s32.totalorder %s51, %s52
      %p64 = scmp.eq.s32.totalorder %s21, 1
      %p65 = por %p63, %p64
      %p67 = scmp.ne.s32.totalorder %s52, %s66
      %p68 = scmp.eq.s32.totalorder %s21, 0
      %p69 = por %p67, %p68
      %s71 = sadd.s32 %s70, 1
      %p74 = scmp.eq.s32.totalorder %s15, 1
      %p75 = scmp.ne.s32.totalorder %s70, %s72
      %p76 = scmp.eq.s32.totalorder %s15, 0
      %p77 = por %p75, %p76
      %p78 = scmp.ne.s32.totalorder %s70, %s72
      %p79 = scmp.eq.s32.totalorder %s20, 1
      %p80 = por %p78, %p79
      %p81 = scmp.ne.s32.totalorder %s72, %s73
      %p82 = scmp.eq.s32.totalorder %s20, 0
      %p83 = por %p81, %p82
      %p84 = scmp.ne.s32.totalorder %s72, %s73
      %p85 = scmp.eq.s32.totalorder %s21, 1
      %p86 = por %p84, %p85
      %p88 = scmp.ne.s32.totalorder %s73, %s87
      %p89 = scmp.eq.s32.totalorder %s21, 0
      %p90 = por %p88, %p89
      %s91 = ssub.s32 %s15, %s22
      %p92 = scmp.eq.s32.totalorder %s91, 0
      %s94 = sadd.s32 %s93, 1
      %s95 = scalar_select %p92, %s93, %s94
      %p98 = pneg %p92
      %p99 = scmp.eq.s32.totalorder %s15, 1
      %p100 = por %p98, %p99
      %p101 = scmp.ne.s32.totalorder %s93, %s96
      %p102 = scmp.eq.s32.totalorder %s15, 0
      %p103 = por %p101, %p102
      %p104 = scmp.ne.s32.totalorder %s93, %s96
      %p105 = scmp.eq.s32.totalorder %s20, 1
      %p106 = por %p104, %p105
      %p107 = scmp.ne.s32.totalorder %s96, %s97
      %p108 = scmp.eq.s32.totalorder %s20, 0
      %p109 = por %p107, %p108
      %p110 = scmp.ne.s32.totalorder %s96, %s97
      %p111 = scmp.eq.s32.totalorder %s21, 1
      %p112 = por %p110, %p111
      %p114 = scmp.ne.s32.totalorder %s97, %s113
      %p115 = scmp.eq.s32.totalorder %s21, 0
      %p116 = por %p114, %p115
      %s117 = ssub.s32 %s15, %s22
      %p118 = scmp.eq.s32.totalorder %s117, 0
      %s120 = sadd.s32 %s119, 1
      %s121 = scalar_select %p118, %s119, %s120
      %p124 = pneg %p118
      %p125 = scmp.eq.s32.totalorder %s15, 1
      %p126 = por %p124, %p125
      %p127 = scmp.ne.s32.totalorder %s119, %s122
      %p128 = scmp.eq.s32.totalorder %s15, 0
      %p129 = por %p127, %p128
      %p130 = scmp.ne.s32.totalorder %s119, %s122
      %p131 = scmp.eq.s32.totalorder %s20, 1
      %p132 = por %p130, %p131
      %p133 = scmp.ne.s32.totalorder %s122, %s123
      %p134 = scmp.eq.s32.totalorder %s20, 0
      %p135 = por %p133, %p134
      %p136 = scmp.ne.s32.totalorder %s122, %s123
      %p137 = scmp.eq.s32.totalorder %s21, 1
      %p138 = por %p136, %p137
      %p140 = scmp.ne.s32.totalorder %s123, %s139
      %p141 = scmp.eq.s32.totalorder %s21, 0
      %p142 = por %p140, %p141
      %p143 = scmp.le.s32.totalorder 1, %s15
      %p144 = scmp.lt.s32.totalorder %s15, 3
      %p145 = pnand %p143, %p144
      %p146 = pneg %p145
      // Predicated region
      $region9: #{decoder_forward.3} parent=5 // pred_check
        _
      $region10: #{decoder_forward.3} parent=5 // pred_check_branch
        %148 = sbr.rel (%p145) target = $region12
      $region11: #{decoder_forward.3} parent=5 // pred_region
        %s149 = ssub.s32 %s15, 1
        // Predicated region
        $region13: #{decoder_forward.3} parent=11 // pred_check
          %p150 = pneg %p62
        $region14: #{decoder_forward.3} parent=11 // pred_check_branch
          %152 = sbr.rel (%p150) target = $region16
        $region15: #{decoder_forward.3} parent=11 // pred_region
          %s154 = ssub.s32 1024, 1024
          %155 = vsyncadd [#allocation5], %s154
          %s156 = sshll.u32 [#allocation4], 4
          %s157 = int_to_ptr.vmem [resolvable:$true] %s156
          %162 = dma.hbm_to_vmem [thread:$0]  %s1, 1024, %s157, [#allocation5], 64, 64, 4
        $region16: #{decoder_forward.3} parent=11 // pred_fallthru
          _
        // Predicated region
        $region17: #{decoder_forward.3} parent=11 // pred_check
          %p163 = pneg %p83
        $region18: #{decoder_forward.3} parent=11 // pred_check_branch
          %165 = sbr.rel (%p163) target = $region20
        $region19: #{decoder_forward.3} parent=11 // pred_region
          _
        $region20: #{decoder_forward.3} parent=11 // pred_fallthru
          _
      $region12: #{decoder_forward.3} parent=5 // pred_fallthru
        _
      %p166 = scmp.lt.s32.totalorder %s15, 2
      // Predicated region
      $region21: #{decoder_forward.3} parent=5 // pred_check
        %p167 = pneg %p166
      $region22: #{decoder_forward.3} parent=5 // pred_check_branch
        %169 = sbr.rel (%p167) target = $region24
      $region23: #{decoder_forward.3} parent=5 // pred_region
        // Predicated region
        $region25: #{decoder_forward.3} parent=23 // pred_check
          %p170 = pneg %p35
        $region26: #{decoder_forward.3} parent=23 // pred_check_branch
          %172 = sbr.rel (%p170) target = $region28
        $region27: #{decoder_forward.3} parent=23 // pred_region
          %s173 = sand.u32 %s25, 1
          %s174 = scalar_lea.sflag [#allocation3], %s173
          %s175 = sand.u32 %s25, 1
          %s176 = smul.addr %s175, 16
          %s177 = scalar_lea.vmem [#allocation2], %s176
          %s178 = smul.u32 2, %s15
          %s180 = ssub.s32 256, 256
          %181 = vsyncadd %s174, %s180
          %s182 = smul.addr %s178, 128
          %s183 = scalar_lea.hbm %s0, %s182
          %s184 = sshll.u32 %s177, 4
          %s185 = int_to_ptr.vmem [resolvable:$true] %s184
          %190 = dma.hbm_to_vmem [thread:$0]  %s183, 256, %s185, %s174, 128, 128, 8
        $region28: #{decoder_forward.3} parent=23 // pred_fallthru
          _
      $region24: #{decoder_forward.3} parent=5 // pred_fallthru
        _
      %p191 = scmp.le.s32.totalorder 1, %s15
      %p192 = scmp.lt.s32.totalorder %s15, 3
      %p193 = pnand %p191, %p192
      %p194 = pneg %p193
      // Predicated region
      $region29: #{decoder_forward.3} parent=5 // pred_check
        _
      $region30: #{decoder_forward.3} parent=5 // pred_check_branch
        %196 = sbr.rel (%p193) target = $region32
      $region31: #{decoder_forward.3} parent=5 // pred_region
        %s197 = ssub.s32 %s15, 1
        %s198 = sand.u32 %s28, 1
        %s199 = scalar_lea.sflag [#allocation3], %s198
        %s200 = sand.u32 %s28, 1
        %s201 = smul.addr %s200, 16
        %s202 = scalar_lea.vmem [#allocation2], %s201
        // Predicated region
        $region33: #{decoder_forward.3} parent=31 // pred_check
          %p203 = pneg %p41
        $region34: #{decoder_forward.3} parent=31 // pred_check_branch
          %205 = sbr.rel (%p203) target = $region36
        $region35: #{decoder_forward.3} parent=31 // pred_region
          %206 = dma.done %s199, 256
        $region36: #{decoder_forward.3} parent=31 // pred_fallthru
          _
        // Predicated region
        $region37: #{decoder_forward.3} parent=31 // pred_check
          %p207 = pneg %p62
        $region38: #{decoder_forward.3} parent=31 // pred_check_branch
          %209 = sbr.rel (%p207) target = $region40
        $region39: #{decoder_forward.3} parent=31 // pred_region
          %210 = dma.done [#allocation5], 1024
        $region40: #{decoder_forward.3} parent=31 // pred_fallthru
          _
        %s211 = sand.u32 %s28, 1
        %s212 = scalar_lea.sflag [#allocation3], %s211
        %s213 = sand.u32 %s28, 1
        %s214 = smul.addr %s213, 16
        %s215 = scalar_lea.vmem [#allocation2], %s214
        %p216 = pneg %p41
        %p217 = pneg %p38
        %p218 = pneg %p62
        %p219 = pneg %p59
        %p220 = pneg %p83
        %p221 = pneg %p80
        %p222 = pneg %p109
        %p223 = pneg %p106
        %s224 = smul.u32 2, %s20
        %p225 = scmp.lt.s32.totalorder %s224, 3
        %s226 = scalar_select %p225, %s224, 3
        %s227 = smul.addr %s226, 4
        %s228 = scalar_lea.vmem %s3, %s227
        %p229 = pneg %p135
        %p230 = pneg %p132
        %p231 = scmp.lt.s32.totalorder %s20, 1
        %s232 = scalar_select %p231, %s20, 1
        %s233 = smul.addr %s232, 2
        %s234 = scalar_lea.vmem %s4, %s233
        %s235 = smul.u32 2, %s20
        %s236 = smul.u32 2, %s20
        %p237 = scmp.lt.s32.totalorder %s236, 3
        %s238 = scalar_select %p237, %s236, 3
        %s239 = smul.addr %s238, 4
        %s240 = scalar_lea.vmem %s3, %s239
        %s241 = smul.u32 2, %s20
        %p242 = scmp.lt.s32.totalorder %s20, 1
        %s243 = scalar_select %p242, %s20, 1
        %s244 = smul.addr %s243, 2
        %s245 = scalar_lea.vmem %s4, %s244
        %v247 = vld [vmem:[%s202] sm:$0xff]
        %v248 = vld [vmem:[%s202 + $0x8] sm:$0xff]
        %v249 = vpack.c.bf16 %v248, %v247
        %v250 = vld [vmem:[#allocation4] sm:$0xf]
        %v251 = vld [vmem:[#allocation4 + $0x4] sm:$0xf]
        %v252 = vld [vmem:[#allocation4 + $0x8] sm:$0xf]
        %v253 = vld [vmem:[#allocation4 + $0xc] sm:$0xf]
        %v254 = vld [vmem:[#allocation4 + $0x10] sm:$0xf]
        %v255 = vld [vmem:[#allocation4 + $0x14] sm:$0xf]
        %v256 = vld [vmem:[#allocation4 + $0x18] sm:$0xf]
        %v257 = vld [vmem:[#allocation4 + $0x1c] sm:$0xf]
        %v258 = vld [vmem:[#allocation4 + $0x20] sm:$0xf]
        %v259 = vld [vmem:[#allocation4 + $0x24] sm:$0xf]
        %v260 = vld [vmem:[#allocation4 + $0x28] sm:$0xf]
        %v261 = vld [vmem:[#allocation4 + $0x2c] sm:$0xf]
        %v262 = vld [vmem:[#allocation4 + $0x30] sm:$0xf]
        %v263 = vld [vmem:[#allocation4 + $0x34] sm:$0xf]
        %v264 = vld [vmem:[#allocation4 + $0x38] sm:$0xf]
        %v265 = vld [vmem:[#allocation4 + $0x3c] sm:$0xf]
        %v266 = vld [vmem:[%s2] sm:$0x1]
        %v268 = vlaneseq
        %v269 = vshrl.u32 %v268, 7
        %v270 = vsub.s32 0, %v269
        %v271 = vrot.slane %v266, %v270
        %v289 = vunpack.c.l.b16 %v250
        %v290 = vunpack.c.l.b16 %v251
        %v291 = vunpack.c.l.b16 %v252
        %v292 = vunpack.c.l.b16 %v253
        %v293 = vunpack.c.l.b16 %v254
        %v294 = vunpack.c.l.b16 %v255
        %v295 = vunpack.c.l.b16 %v256
        %v296 = vunpack.c.l.b16 %v257
        %v297 = vunpack.c.l.b16 %v258
        %v298 = vunpack.c.l.b16 %v259
        %v299 = vunpack.c.l.b16 %v260
        %v300 = vunpack.c.l.b16 %v261
        %v301 = vunpack.c.l.b16 %v262
        %v302 = vunpack.c.l.b16 %v263
        %v303 = vunpack.c.l.b16 %v264
        %v304 = vunpack.c.l.b16 %v265
        %v305 = vpack.c.b16 %v290, %v289
        %v306 = vpack.c.b16 %v292, %v291
        %v307 = vpack.c.b16 %v294, %v293
        %v308 = vpack.c.b16 %v296, %v295
        %v309 = vpack.c.b16 %v298, %v297
        %v310 = vpack.c.b16 %v300, %v299
        %v311 = vpack.c.b16 %v302, %v301
        %v312 = vpack.c.b16 %v304, %v303
        %321 = vmatprep.subr.bf16.mxu0 0
        %322 = vmatpush1.bf16.msra.mxu0 %v305
        %323 = vmatprep.subr.bf16.mxu0 0
        %324 = vmatpush1.bf16.msra.mxu0 %v306
        %325 = vmatprep.subr.bf16.mxu0 0
        %326 = vmatpush1.bf16.msra.mxu0 %v307
        %327 = vmatprep.subr.bf16.mxu0 0
        %328 = vmatpush1.bf16.msra.mxu0 %v308
        %329 = vmatprep.subr.bf16.mxu0 0
        %330 = vmatpush1.bf16.msra.mxu0 %v309
        %331 = vmatprep.subr.bf16.mxu0 0
        %332 = vmatpush1.bf16.msra.mxu0 %v310
        %333 = vmatprep.subr.bf16.mxu0 0
        %334 = vmatpush1.bf16.msra.mxu0 %v311
        %335 = vmatprep.subr.bf16.mxu0 0
        %336 = vmatpush1.bf16.msra.mxu0 %v312
        %337 = vmatprep.subr.bf16.mxu0 0
        %338 = vmatpush1.bf16.msra.mxu0 0
        %339 = vmatprep.subr.bf16.mxu0 0
        %340 = vmatpush1.bf16.msra.mxu0 0
        %341 = vmatprep.subr.bf16.mxu0 0
        %342 = vmatpush1.bf16.msra.mxu0 0
        %343 = vmatprep.subr.bf16.mxu0 0
        %344 = vmatpush1.bf16.msra.mxu0 0
        %345 = vmatprep.subr.bf16.mxu0 0
        %346 = vmatpush1.bf16.msra.mxu0 0
        %347 = vmatprep.subr.bf16.mxu0 0
        %348 = vmatpush1.bf16.msra.mxu0 0
        %349 = vmatprep.subr.bf16.mxu0 0
        %350 = vmatpush1.bf16.msra.mxu0 0
        %351 = vmatprep.subr.bf16.mxu0 0
        %352 = vmatpush1.bf16.msra.mxu0 0
        %353 = vmatprep.mubr.bf16.mxu0 0
        %354 = vmatmul.mubr.bf16.gmra.mrb[0].mxu0 %v249
        %v355 = vpop.f32.mrb[0].mxu0
        %v356 = vadd.f32 %v271, %v355
        %v357 = vpop.f32.mrb[0].mxu0
        %v358 = vpop.f32.mrb[0].mxu0
        %v359 = vadd.f32 %v271, %v358
        %v360 = vpop.f32.mrb[0].mxu0
        %361 = vdwg.mxu0
        %v362 = vmax.f32 %v356, 0.0
        %v363 = vmax.f32 %v359, 0.0
        %v364 = vpack.c.bf16 %v363, %v362
        %v366 = vunpack.c.l.b16 %v364
        %v367 = vunpack.c.h.b16 %v364
        %v368 = vpack.c.b16 %v366, %v366
        %v369 = vpack.c.b16 %v367, %v367
        %372 = vst [vmem:[%s240] sm:$0xf] %v368
        %373 = vst [vmem:[%s240 + $0x4] sm:$0xf] %v369
        %v374 = vunpack.c.l.bf16 %v364
        %v375 = vunpack.c.h.bf16 %v364
        %v376 = vadd.f32 %v374, %v375
        %v377 = vrot.slane %v376, 4
        %v378 = vadd.f32 %v376, %v377
        %v379 = vrot.slane %v378, 2
        %v380 = vadd.f32 %v378, %v379
        %v381 = vrot.slane %v380, 1
        %v382 = vadd.f32 %v380, %v381
        %383 = vst [vmem:[%s245] sm:$0x1] %v382
        %v384 = vmul.f32 %v374, %v374
        %v385 = vmul.f32 %v375, %v375
        %v386 = vadd.f32 %v384, %v385
        %v387 = vrot.slane %v386, 4
        %v388 = vadd.f32 %v386, %v387
        %v389 = vrot.slane %v388, 2
        %v390 = vadd.f32 %v388, %v389
        %v391 = vrot.slane %v390, 1
        %v392 = vadd.f32 %v390, %v391
        %393 = vst [vmem:[%s245 + $0x1] sm:$0x1] %v392
        %s394 = smul.u32 2, %s20
        %p395 = scmp.lt.s32.totalorder %s394, 3
        %s396 = scalar_select %p395, %s394, 3
        %s397 = smul.addr %s396, 4
        %s398 = scalar_lea.vmem %s3, %s397
        %p399 = scmp.lt.s32.totalorder %s20, 1
        %s400 = scalar_select %p399, %s20, 1
        %s401 = smul.addr %s400, 2
        %s402 = scalar_lea.vmem %s4, %s401
        // Predicated region
        $region41: #{decoder_forward.3} parent=31 // pred_check
          %p403 = pneg %p106
        $region42: #{decoder_forward.3} parent=31 // pred_check_branch
          %405 = sbr.rel (%p403) target = $region44
        $region43: #{decoder_forward.3} parent=31 // pred_region
          %s406 = smul.u32 2, %s20
        $region44: #{decoder_forward.3} parent=31 // pred_fallthru
          _
        // Predicated region
        $region45: #{decoder_forward.3} parent=31 // pred_check
          %p407 = pneg %p132
        $region46: #{decoder_forward.3} parent=31 // pred_check_branch
          %409 = sbr.rel (%p407) target = $region48
        $region47: #{decoder_forward.3} parent=31 // pred_region
          _
        $region48: #{decoder_forward.3} parent=31 // pred_fallthru
          _
      $region32: #{decoder_forward.3} parent=5 // pred_fallthru
        _
      %p410 = scmp.le.s32.totalorder 2, %s15
      // Predicated region
      $region49: #{decoder_forward.3} parent=5 // pred_check
        %p411 = pneg %p410
      $region50: #{decoder_forward.3} parent=5 // pred_check_branch
        %413 = sbr.rel (%p411) target = $region52
      $region51: #{decoder_forward.3} parent=5 // pred_region
        %s414 = ssub.s32 %s15, 2
        // Predicated region
        $region53: #{decoder_forward.3} parent=51 // pred_check
          %p415 = pneg %p112
        $region54: #{decoder_forward.3} parent=51 // pred_check_branch
          %417 = sbr.rel (%p415) target = $region56
        $region55: #{decoder_forward.3} parent=51 // pred_region
          %s418 = smul.u32 2, %s21
          %p419 = scmp.lt.s32.totalorder %s418, 3
          %s420 = scalar_select %p419, %s418, 3
          %s421 = smul.addr %s420, 4
          %s422 = scalar_lea.vmem %s3, %s421
        $region56: #{decoder_forward.3} parent=51 // pred_fallthru
          _
        // Predicated region
        $region57: #{decoder_forward.3} parent=51 // pred_check
          %p423 = pneg %p138
        $region58: #{decoder_forward.3} parent=51 // pred_check_branch
          %425 = sbr.rel (%p423) target = $region60
        $region59: #{decoder_forward.3} parent=51 // pred_region
          %p426 = scmp.lt.s32.totalorder %s21, 1
          %s427 = scalar_select %p426, %s21, 1
          %s428 = smul.addr %s427, 2
          %s429 = scalar_lea.vmem %s4, %s428
        $region60: #{decoder_forward.3} parent=51 // pred_fallthru
          _
      $region52: #{decoder_forward.3} parent=5 // pred_fallthru
        _
    $region6: #{decoder_forward.3} parent=1 // loop_footer
      %s19 = sadd.s32 1, %s15
    $region7: #{decoder_forward.3} parent=1 // loop_footer_branch
      %14 = sbr.rel target = $region3
    $region8: #{decoder_forward.3} parent=1 // loop_exit
      _
    %430 = vsyncpa [#allocation3], 1
    %s431 = scalar_lea.sflag [#allocation3], 1
    %432 = vsyncpa %s431, 1
    %433 = vsyncpa [#allocation5], 1

// kernel: decoder_forward.4
$region0: #{decoder_forward.4}
  #allocation0 [shape = 'u32[]', space=smem, size = 0x4, offset = 0x4, fixed_abs, tag = 'smem constant byte address 0x4 - core index']
  #allocation1 [shape = 'u32[144,128]{1,0:T(1,128)}', space=vmem, size = 0x12000, scoped, tag = 'internal scratch']
  %s0 = inlined_call_operand.vmem [shape: bf16[32,128], index: 0, kind: input, shape index: {}]
  %s1 = inlined_call_operand.vmem [shape: bf16[128,128], index: 1, kind: input, shape index: {}]
  %s2 = inlined_call_operand.vmem [shape: f32[1,128], index: 2, kind: input, shape index: {}]
  %s3 = inlined_call_operand.vmem [shape: bf16[32,128], index: 3, kind: output, shape index: {0}]
  %s4 = inlined_call_operand.vmem [shape: f32[2,2,128], index: 4, kind: output, shape index: {1}]
  %5 = xla_tuple %s3, %s4
  %s6 = sld [smem:[#allocation0]]
  $region53: #{decoder_forward.4} parent=0
    _
  %s8 = ssub.s32 1, %s6
  %s9 = scalar_select 0, %s8, %s6
  loop: start=0, step=1, limit=4
  $region2: #{decoder_forward.4} parent=0 // loop_pre_header
    _
  $region3: #{decoder_forward.4} parent=0 // loop_header
    %s11 = sphi 0, %s15
    %p12 = scmp.ge.s32.totalorder %s11, 4
    %s21 = sphi 0, %s23
    %s24 = sphi 0, %s21
    %s25 = sphi 0, %s24
    %s41 = sphi 0, %s25
    %s45 = sphi 0, %s45
    %s47 = sphi 0, %s45
    %s48 = sphi 0, %s47
    %s62 = sphi 0, %s48
    %s66 = sphi 0, %s66
    %s68 = sphi 0, %s66
    %s69 = sphi 0, %s68
    %s83 = sphi 0, %s69
    %s89 = sphi 0, %s91
    %s92 = sphi 0, %s89
    %s93 = sphi 0, %s92
    %s109 = sphi 0, %s93
    %s115 = sphi 0, %s117
    %s118 = sphi 0, %s115
    %s119 = sphi 0, %s118
    %s135 = sphi 0, %s119
  $region4: #{decoder_forward.4} parent=0 // loop_header_branch
    %14 = sbr.rel (%p12) target = $region8
  $region5: #{decoder_forward.4} parent=0 // loop_body
    %s16 = ssub.s32 %s11, 1
    %s17 = ssub.s32 %s11, 2
    %s18 = sadd.s32 %s11, 1
    %s19 = ssub.s32 %s11, %s18
    %p20 = scmp.eq.s32.totalorder %s19, 0
    %s22 = sadd.s32 %s21, 1
    %s23 = scalar_select %p20, %s21, %s22
    %p26 = pneg %p20
    %p27 = scmp.eq.s32.totalorder %s11, 1
    %p28 = por %p26, %p27
    %p29 = scmp.ne.s32.totalorder %s21, %s24
    %p30 = scmp.eq.s32.totalorder %s11, 0
    %p31 = por %p29, %p30
    %p32 = scmp.ne.s32.totalorder %s21, %s24
    %p33 = scmp.eq.s32.totalorder %s16, 1
    %p34 = por %p32, %p33
    %p35 = scmp.ne.s32.totalorder %s24, %s25
    %p36 = scmp.eq.s32.totalorder %s16, 0
    %p37 = por %p35, %p36
    %p38 = scmp.ne.s32.totalorder %s24, %s25
    %p39 = scmp.eq.s32.totalorder %s17, 1
    %p40 = por %p38, %p39
    %p42 = scmp.ne.s32.totalorder %s25, %s41
    %p43 = scmp.eq.s32.totalorder %s17, 0
    %p44 = por %p42, %p43
    %s46 = sadd.s32 %s45, 1
    %p49 = scmp.eq.s32.totalorder %s11, 1
    %p50 = scmp.ne.s32.totalorder %s45, %s47
    %p51 = scmp.eq.s32.totalorder %s11, 0
    %p52 = por %p50, %p51
    %p53 = scmp.ne.s32.totalorder %s45, %s47
    %p54 = scmp.eq.s32.totalorder %s16, 1
    %p55 = por %p53, %p54
    %p56 = scmp.ne.s32.totalorder %s47, %s48
    %p57 = scmp.eq.s32.totalorder %s16, 0
    %p58 = por %p56, %p57
    %p59 = scmp.ne.s32.totalorder %s47, %s48
    %p60 = scmp.eq.s32.totalorder %s17, 1
    %p61 = por %p59, %p60
    %p63 = scmp.ne.s32.totalorder %s48, %s62
    %p64 = scmp.eq.s32.totalorder %s17, 0
    %p65 = por %p63, %p64
    %s67 = sadd.s32 %s66, 1
    %p70 = scmp.eq.s32.totalorder %s11, 1
    %p71 = scmp.ne.s32.totalorder %s66, %s68
    %p72 = scmp.eq.s32.totalorder %s11, 0
    %p73 = por %p71, %p72
    %p74 = scmp.ne.s32.totalorder %s66, %s68
    %p75 = scmp.eq.s32.totalorder %s16, 1
    %p76 = por %p74, %p75
    %p77 = scmp.ne.s32.totalorder %s68, %s69
    %p78 = scmp.eq.s32.totalorder %s16, 0
    %p79 = por %p77, %p78
    %p80 = scmp.ne.s32.totalorder %s68, %s69
    %p81 = scmp.eq.s32.totalorder %s17, 1
    %p82 = por %p80, %p81
    %p84 = scmp.ne.s32.totalorder %s69, %s83
    %p85 = scmp.eq.s32.totalorder %s17, 0
    %p86 = por %p84, %p85
    %s87 = ssub.s32 %s11, %s18
    %p88 = scmp.eq.s32.totalorder %s87, 0
    %s90 = sadd.s32 %s89, 1
    %s91 = scalar_select %p88, %s89, %s90
    %p94 = pneg %p88
    %p95 = scmp.eq.s32.totalorder %s11, 1
    %p96 = por %p94, %p95
    %p97 = scmp.ne.s32.totalorder %s89, %s92
    %p98 = scmp.eq.s32.totalorder %s11, 0
    %p99 = por %p97, %p98
    %p100 = scmp.ne.s32.totalorder %s89, %s92
    %p101 = scmp.eq.s32.totalorder %s16, 1
    %p102 = por %p100, %p101
    %p103 = scmp.ne.s32.totalorder %s92, %s93
    %p104 = scmp.eq.s32.totalorder %s16, 0
    %p105 = por %p103, %p104
    %p106 = scmp.ne.s32.totalorder %s92, %s93
    %p107 = scmp.eq.s32.totalorder %s17, 1
    %p108 = por %p106, %p107
    %p110 = scmp.ne.s32.totalorder %s93, %s109
    %p111 = scmp.eq.s32.totalorder %s17, 0
    %p112 = por %p110, %p111
    %s113 = ssub.s32 %s11, %s18
    %p114 = scmp.eq.s32.totalorder %s113, 0
    %s116 = sadd.s32 %s115, 1
    %s117 = scalar_select %p114, %s115, %s116
    %p120 = pneg %p114
    %p121 = scmp.eq.s32.totalorder %s11, 1
    %p122 = por %p120, %p121
    %p123 = scmp.ne.s32.totalorder %s115, %s118
    %p124 = scmp.eq.s32.totalorder %s11, 0
    %p125 = por %p123, %p124
    %p126 = scmp.ne.s32.totalorder %s115, %s118
    %p127 = scmp.eq.s32.totalorder %s16, 1
    %p128 = por %p126, %p127
    %p129 = scmp.ne.s32.totalorder %s118, %s119
    %p130 = scmp.eq.s32.totalorder %s16, 0
    %p131 = por %p129, %p130
    %p132 = scmp.ne.s32.totalorder %s118, %s119
    %p133 = scmp.eq.s32.totalorder %s17, 1
    %p134 = por %p132, %p133
    %p136 = scmp.ne.s32.totalorder %s119, %s135
    %p137 = scmp.eq.s32.totalorder %s17, 0
    %p138 = por %p136, %p137
    %p139 = scmp.le.s32.totalorder 1, %s11
    %p140 = scmp.lt.s32.totalorder %s11, 3
    %p141 = pnand %p139, %p140
    %p142 = pneg %p141
    // Predicated region
    $region9: #{decoder_forward.4} parent=5 // pred_check
      _
    $region10: #{decoder_forward.4} parent=5 // pred_check_branch
      %144 = sbr.rel (%p141) target = $region12
    $region11: #{decoder_forward.4} parent=5 // pred_region
      %s145 = ssub.s32 %s11, 1
      // Predicated region
      $region13: #{decoder_forward.4} parent=11 // pred_check
        %p146 = pneg %p58
      $region14: #{decoder_forward.4} parent=11 // pred_check_branch
        %148 = sbr.rel (%p146) target = $region16
      $region15: #{decoder_forward.4} parent=11 // pred_region
        _
      $region16: #{decoder_forward.4} parent=11 // pred_fallthru
        _
      // Predicated region
      $region17: #{decoder_forward.4} parent=11 // pred_check
        %p149 = pneg %p79
      $region18: #{decoder_forward.4} parent=11 // pred_check_branch
        %151 = sbr.rel (%p149) target = $region20
      $region19: #{decoder_forward.4} parent=11 // pred_region
        _
      $region20: #{decoder_forward.4} parent=11 // pred_fallthru
        _
    $region12: #{decoder_forward.4} parent=5 // pred_fallthru
      _
    %p152 = scmp.lt.s32.totalorder %s11, 2
    // Predicated region
    $region21: #{decoder_forward.4} parent=5 // pred_check
      %p153 = pneg %p152
    $region22: #{decoder_forward.4} parent=5 // pred_check_branch
      %155 = sbr.rel (%p153) target = $region24
    $region23: #{decoder_forward.4} parent=5 // pred_region
      // Predicated region
      $region25: #{decoder_forward.4} parent=23 // pred_check
        %p156 = pneg %p31
      $region26: #{decoder_forward.4} parent=23 // pred_check_branch
        %158 = sbr.rel (%p156) target = $region28
      $region27: #{decoder_forward.4} parent=23 // pred_region
        %s159 = smul.u32 2, %s11
        %p160 = scmp.lt.s32.totalorder %s159, 3
        %s161 = scalar_select %p160, %s159, 3
        %s162 = smul.addr %s161, 4
        %s163 = scalar_lea.vmem %s0, %s162
        %s164 = smul.u32 2, %s11
      $region28: #{decoder_forward.4} parent=23 // pred_fallthru
        _
    $region24: #{decoder_forward.4} parent=5 // pred_fallthru
      _
    %p165 = scmp.le.s32.totalorder 1, %s11
    %p166 = scmp.lt.s32.totalorder %s11, 3
    %p167 = pnand %p165, %p166
    %p168 = pneg %p167
    // Predicated region
    $region29: #{decoder_forward.4} parent=5 // pred_check
      _
    $region30: #{decoder_forward.4} parent=5 // pred_check_branch
      %170 = sbr.rel (%p167) target = $region32
    $region31: #{decoder_forward.4} parent=5 // pred_region
      %s171 = ssub.s32 %s11, 1
      %s172 = smul.u32 2, %s16
      %p173 = scmp.lt.s32.totalorder %s172, 3
      %s174 = scalar_select %p173, %s172, 3
      %s175 = smul.addr %s174, 4
      %s176 = scalar_lea.vmem %s0, %s175
      %p177 = pneg %p37
      %p178 = pneg %p34
      %p179 = pneg %p58
      %p180 = pneg %p55
      %p181 = pneg %p79
      %p182 = pneg %p76
      %p183 = pneg %p105
      %p184 = pneg %p102
      %s185 = smul.u32 2, %s16
      %p186 = scmp.lt.s32.totalorder %s185, 3
      %s187 = scalar_select %p186, %s185, 3
      %s188 = smul.addr %s187, 4
      %s189 = scalar_lea.vmem %s3, %s188
      %p190 = pneg %p131
      %p191 = pneg %p128
      %p192 = scmp.lt.s32.totalorder %s16, 1
      %s193 = scalar_select %p192, %s16, 1
      %s194 = smul.addr %s193, 2
      %s195 = scalar_lea.vmem %s4, %s194
      %s196 = smul.u32 2, %s16
      %p197 = scmp.lt.s32.totalorder %s196, 3
      %s198 = scalar_select %p197, %s196, 3
      %s199 = smul.addr %s198, 4
      %s200 = scalar_lea.vmem %s0, %s199
      %s201 = smul.u32 2, %s16
      %s202 = smul.u32 2, %s16
      %p203 = scmp.lt.s32.totalorder %s202, 3
      %s204 = scalar_select %p203, %s202, 3
      %s205 = smul.addr %s204, 4
      %s206 = scalar_lea.vmem %s3, %s205
      %s207 = smul.u32 2, %s16
      %p208 = scmp.lt.s32.totalorder %s16, 1
      %s209 = scalar_select %p208, %s16, 1
      %s210 = smul.addr %s209, 2
      %s211 = scalar_lea.vmem %s4, %s210
      %v213 = vld [vmem:[%s200] sm:$0xf]
      %v214 = vld [vmem:[%s200 + $0x4] sm:$0xf]
      %v215 = vld [vmem:[%s1] sm:$0xf]
      %v216 = vld [vmem:[%s1 + $0x4] sm:$0xf]
      %v217 = vld [vmem:[%s1 + $0x8] sm:$0xf]
      %v218 = vld [vmem:[%s1 + $0xc] sm:$0xf]
      %v219 = vld [vmem:[%s1 + $0x10] sm:$0xf]
      %v220 = vld [vmem:[%s1 + $0x14] sm:$0xf]
      %v221 = vld [vmem:[%s1 + $0x18] sm:$0xf]
      %v222 = vld [vmem:[%s1 + $0x1c] sm:$0xf]
      %v223 = vld [vmem:[%s1 + $0x20] sm:$0xf]
      %v224 = vld [vmem:[%s1 + $0x24] sm:$0xf]
      %v225 = vld [vmem:[%s1 + $0x28] sm:$0xf]
      %v226 = vld [vmem:[%s1 + $0x2c] sm:$0xf]
      %v227 = vld [vmem:[%s1 + $0x30] sm:$0xf]
      %v228 = vld [vmem:[%s1 + $0x34] sm:$0xf]
      %v229 = vld [vmem:[%s1 + $0x38] sm:$0xf]
      %v230 = vld [vmem:[%s1 + $0x3c] sm:$0xf]
      %v231 = vld [vmem:[%s2] sm:$0x1]
      %v233 = vlaneseq
      %v234 = vshrl.u32 %v233, 7
      %v235 = vsub.s32 0, %v234
      %v236 = vrot.slane %v231, %v235
      %v240 = vunpack.c.l.b16 %v213
      %v241 = vunpack.c.l.b16 %v214
      %v242 = vpack.c.b16 %v241, %v240
      %v260 = vunpack.c.l.b16 %v215
      %v261 = vunpack.c.l.b16 %v216
      %v262 = vunpack.c.l.b16 %v217
      %v263 = vunpack.c.l.b16 %v218
      %v264 = vunpack.c.l.b16 %v219
      %v265 = vunpack.c.l.b16 %v220
      %v266 = vunpack.c.l.b16 %v221
      %v267 = vunpack.c.l.b16 %v222
      %v268 = vunpack.c.l.b16 %v223
      %v269 = vunpack.c.l.b16 %v224
      %v270 = vunpack.c.l.b16 %v225
      %v271 = vunpack.c.l.b16 %v226
      %v272 = vunpack.c.l.b16 %v227
      %v273 = vunpack.c.l.b16 %v228
      %v274 = vunpack.c.l.b16 %v229
      %v275 = vunpack.c.l.b16 %v230
      %v276 = vpack.c.b16 %v261, %v260
      %v277 = vpack.c.b16 %v263, %v262
      %v278 = vpack.c.b16 %v265, %v264
      %v279 = vpack.c.b16 %v267, %v266
      %v280 = vpack.c.b16 %v269, %v268
      %v281 = vpack.c.b16 %v271, %v270
      %v282 = vpack.c.b16 %v273, %v272
      %v283 = vpack.c.b16 %v275, %v274
      %292 = vmatprep.subr.bf16.mxu0 0
      %293 = vmatpush1.bf16.msra.mxu0 %v276
      %294 = vmatprep.subr.bf16.mxu0 0
      %295 = vmatpush1.bf16.msra.mxu0 %v277
      %296 = vmatprep.subr.bf16.mxu0 0
      %297 = vmatpush1.bf16.msra.mxu0 %v278
      %298 = vmatprep.subr.bf16.mxu0 0
      %299 = vmatpush1.bf16.msra.mxu0 %v279
      %300 = vmatprep.subr.bf16.mxu0 0
      %301 = vmatpush1.bf16.msra.mxu0 %v280
      %302 = vmatprep.subr.bf16.mxu0 0
      %303 = vmatpush1.bf16.msra.mxu0 %v281
      %304 = vmatprep.subr.bf16.mxu0 0
      %305 = vmatpush1.bf16.msra.mxu0 %v282
      %306 = vmatprep.subr.bf16.mxu0 0
      %307 = vmatpush1.bf16.msra.mxu0 %v283
      %308 = vmatprep.subr.bf16.mxu0 0
      %309 = vmatpush1.bf16.msra.mxu0 0
      %310 = vmatprep.subr.bf16.mxu0 0
      %311 = vmatpush1.bf16.msra.mxu0 0
      %312 = vmatprep.subr.bf16.mxu0 0
      %313 = vmatpush1.bf16.msra.mxu0 0
      %314 = vmatprep.subr.bf16.mxu0 0
      %315 = vmatpush1.bf16.msra.mxu0 0
      %316 = vmatprep.subr.bf16.mxu0 0
      %317 = vmatpush1.bf16.msra.mxu0 0
      %318 = vmatprep.subr.bf16.mxu0 0
      %319 = vmatpush1.bf16.msra.mxu0 0
      %320 = vmatprep.subr.bf16.mxu0 0
      %321 = vmatpush1.bf16.msra.mxu0 0
      %322 = vmatprep.subr.bf16.mxu0 0
      %323 = vmatpush1.bf16.msra.mxu0 0
      %324 = vmatprep.mubr.bf16.mxu0 0
      %325 = vmatmul.mubr.bf16.gmra.mrb[0].mxu0 %v242
      %v326 = vpop.f32.mrb[0].mxu0
      %v327 = vadd.f32 %v236, %v326
      %v328 = vpop.f32.mrb[0].mxu0
      %v329 = vpop.f32.mrb[0].mxu0
      %v330 = vadd.f32 %v236, %v329
      %v331 = vpop.f32.mrb[0].mxu0
      %332 = vdwg.mxu0
      %v333 = vmax.f32 %v327, 0.0
      %v334 = vmax.f32 %v330, 0.0
      %v335 = vpack.c.bf16 %v334, %v333
      %v337 = vunpack.c.l.b16 %v335
      %v338 = vunpack.c.h.b16 %v335
      %v339 = vpack.c.b16 %v337, %v337
      %v340 = vpack.c.b16 %v338, %v338
      %343 = vst [vmem:[%s206] sm:$0xf] %v339
      %344 = vst [vmem:[%s206 + $0x4] sm:$0xf] %v340
      %v345 = vunpack.c.l.bf16 %v335
      %v346 = vunpack.c.h.bf16 %v335
      %v347 = vadd.f32 %v345, %v346
      %v348 = vrot.slane %v347, 4
      %v349 = vadd.f32 %v347, %v348
      %v350 = vrot.slane %v349, 2
      %v351 = vadd.f32 %v349, %v350
      %v352 = vrot.slane %v351, 1
      %v353 = vadd.f32 %v351, %v352
      %354 = vst [vmem:[%s211] sm:$0x1] %v353
      %v355 = vmul.f32 %v345, %v345
      %v356 = vmul.f32 %v346, %v346
      %v357 = vadd.f32 %v355, %v356
      %v358 = vrot.slane %v357, 4
      %v359 = vadd.f32 %v357, %v358
      %v360 = vrot.slane %v359, 2
      %v361 = vadd.f32 %v359, %v360
      %v362 = vrot.slane %v361, 1
      %v363 = vadd.f32 %v361, %v362
      %364 = vst [vmem:[%s211 + $0x1] sm:$0x1] %v363
      %s365 = smul.u32 2, %s16
      %p366 = scmp.lt.s32.totalorder %s365, 3
      %s367 = scalar_select %p366, %s365, 3
      %s368 = smul.addr %s367, 4
      %s369 = scalar_lea.vmem %s3, %s368
      %p370 = scmp.lt.s32.totalorder %s16, 1
      %s371 = scalar_select %p370, %s16, 1
      %s372 = smul.addr %s371, 2
      %s373 = scalar_lea.vmem %s4, %s372
      // Predicated region
      $region33: #{decoder_forward.4} parent=31 // pred_check
        %p374 = pneg %p102
      $region34: #{decoder_forward.4} parent=31 // pred_check_branch
        %376 = sbr.rel (%p374) target = $region36
      $region35: #{decoder_forward.4} parent=31 // pred_region
        %s377 = smul.u32 2, %s16
      $region36: #{decoder_forward.4} parent=31 // pred_fallthru
        _
      // Predicated region
      $region37: #{decoder_forward.4} parent=31 // pred_check
        %p378 = pneg %p128
      $region38: #{decoder_forward.4} parent=31 // pred_check_branch
        %380 = sbr.rel (%p378) target = $region40
      $region39: #{decoder_forward.4} parent=31 // pred_region
        _
      $region40: #{decoder_forward.4} parent=31 // pred_fallthru
        _
    $region32: #{decoder_forward.4} parent=5 // pred_fallthru
      _
    %p381 = scmp.le.s32.totalorder 2, %s11
    // Predicated region
    $region41: #{decoder_forward.4} parent=5 // pred_check
      %p382 = pneg %p381
    $region42: #{decoder_forward.4} parent=5 // pred_check_branch
      %384 = sbr.rel (%p382) target = $region44
    $region43: #{decoder_forward.4} parent=5 // pred_region
      %s385 = ssub.s32 %s11, 2
      // Predicated region
      $region45: #{decoder_forward.4} parent=43 // pred_check
        %p386 = pneg %p108
      $region46: #{decoder_forward.4} parent=43 // pred_check_branch
        %388 = sbr.rel (%p386) target = $region48
      $region47: #{decoder_forward.4} parent=43 // pred_region
        %s389 = smul.u32 2, %s17
        %p390 = scmp.lt.s32.totalorder %s389, 3
        %s391 = scalar_select %p390, %s389, 3
        %s392 = smul.addr %s391, 4
        %s393 = scalar_lea.vmem %s3, %s392
      $region48: #{decoder_forward.4} parent=43 // pred_fallthru
        _
      // Predicated region
      $region49: #{decoder_forward.4} parent=43 // pred_check
        %p394 = pneg %p134
      $region50: #{decoder_forward.4} parent=43 // pred_check_branch
        %396 = sbr.rel (%p394) target = $region52
      $region51: #{decoder_forward.4} parent=43 // pred_region
        %p397 = scmp.lt.s32.totalorder %s17, 1
        %s398 = scalar_select %p397, %s17, 1
        %s399 = smul.addr %s398, 2
        %s400 = scalar_lea.vmem %s4, %s399
      $region52: #{decoder_forward.4} parent=43 // pred_fallthru
        _
    $region44: #{decoder_forward.4} parent=5 // pred_fallthru
      _
  $region6: #{decoder_forward.4} parent=0 // loop_footer
    %s15 = sadd.s32 1, %s11
  $region7: #{decoder_forward.4} parent=0 // loop_footer_branch
    %10 = sbr.rel target = $region3
  $region8: #{decoder_forward.4} parent=0 // loop_exit
    _

// kernel: decoder_forward.5
$region0: #{decoder_forward.5}
  #allocation0 [shape = 'u32[]', space=smem, size = 0x4, offset = 0x4, fixed_abs, tag = 'smem constant byte address 0x4 - core index']
  #allocation1 [shape = 'u32[144,128]{1,0:T(1,128)}', space=vmem, size = 0x12000, scoped, tag = 'internal scratch']
  %s0 = inlined_call_operand.vmem [shape: bf16[32,128], index: 0, kind: input, shape index: {}]
  %s1 = inlined_call_operand.vmem [shape: bf16[128,128], index: 1, kind: input, shape index: {}]
  %s2 = inlined_call_operand.vmem [shape: f32[1,128], index: 2, kind: input, shape index: {}]
  %s3 = inlined_call_operand.hbm [shape: f32[32,128], index: 3, kind: output, shape index: {}]
  %s4 = sld [smem:[#allocation0]]
  $region22: #{decoder_forward.5} parent=0
    _
  %s6 = ssub.s32 1, %s4
  %s7 = scalar_select 0, %s6, %s4
  $region1: #{decoder_forward.5} parent=0
    #allocation2 [shape = 'u8[16384]{0}', space=vmem, size = 0x4000, scoped, tag = 'output window, operand 0, single buffered']
    #allocation3 [shape = 's32[1]{0}', space=sflag, size = 0x4, scoped, tag = 'scoped memory for decoder_forward.5']
    %8 = vsyncpa [#allocation3], 0
    // Predicated region
    $region2: #{decoder_forward.5} parent=1 // pred_check
      _
    $region3: #{decoder_forward.5} parent=1 // pred_check_branch
      %10 = sbr.rel (0) target = $region5
    $region4: #{decoder_forward.5} parent=1 // pred_region
      _
    $region5: #{decoder_forward.5} parent=1 // pred_fallthru
      _
    // Predicated region
    $region6: #{decoder_forward.5} parent=1 // pred_check
      _
    $region7: #{decoder_forward.5} parent=1 // pred_check_branch
      %12 = sbr.rel (0) target = $region9
    $region8: #{decoder_forward.5} parent=1 // pred_region
      _
    $region9: #{decoder_forward.5} parent=1 // pred_fallthru
      _
    // Predicated region
    $region10: #{decoder_forward.5} parent=1 // pred_check
      _
    $region11: #{decoder_forward.5} parent=1 // pred_check_branch
      %14 = sbr.rel (0) target = $region13
    $region12: #{decoder_forward.5} parent=1 // pred_region
      _
    $region13: #{decoder_forward.5} parent=1 // pred_fallthru
      _
    %v16 = vld [vmem:[%s0] sm:$0xf]
    %v17 = vld [vmem:[%s0 + $0x4] sm:$0xf]
    %v18 = vld [vmem:[%s0 + $0x8] sm:$0xf]
    %v19 = vld [vmem:[%s0 + $0xc] sm:$0xf]
    %v20 = vld [vmem:[%s1] sm:$0xf]
    %v21 = vld [vmem:[%s1 + $0x4] sm:$0xf]
    %v22 = vld [vmem:[%s1 + $0x8] sm:$0xf]
    %v23 = vld [vmem:[%s1 + $0xc] sm:$0xf]
    %v24 = vld [vmem:[%s1 + $0x10] sm:$0xf]
    %v25 = vld [vmem:[%s1 + $0x14] sm:$0xf]
    %v26 = vld [vmem:[%s1 + $0x18] sm:$0xf]
    %v27 = vld [vmem:[%s1 + $0x1c] sm:$0xf]
    %v28 = vld [vmem:[%s1 + $0x20] sm:$0xf]
    %v29 = vld [vmem:[%s1 + $0x24] sm:$0xf]
    %v30 = vld [vmem:[%s1 + $0x28] sm:$0xf]
    %v31 = vld [vmem:[%s1 + $0x2c] sm:$0xf]
    %v32 = vld [vmem:[%s1 + $0x30] sm:$0xf]
    %v33 = vld [vmem:[%s1 + $0x34] sm:$0xf]
    %v34 = vld [vmem:[%s1 + $0x38] sm:$0xf]
    %v35 = vld [vmem:[%s1 + $0x3c] sm:$0xf]
    %v36 = vld [vmem:[%s2] sm:$0x1]
    %v38 = vlaneseq
    %v39 = vshrl.u32 %v38, 7
    %v40 = vsub.s32 0, %v39
    %v41 = vrot.slane %v36, %v40
    %v47 = vunpack.c.l.b16 %v16
    %v48 = vunpack.c.l.b16 %v17
    %v49 = vunpack.c.l.b16 %v18
    %v50 = vunpack.c.l.b16 %v19
    %v51 = vpack.c.b16 %v48, %v47
    %v52 = vpack.c.b16 %v50, %v49
    %v71 = vunpack.c.l.b16 %v20
    %v72 = vunpack.c.l.b16 %v21
    %v73 = vunpack.c.l.b16 %v22
    %v74 = vunpack.c.l.b16 %v23
    %v75 = vunpack.c.l.b16 %v24
    %v76 = vunpack.c.l.b16 %v25
    %v77 = vunpack.c.l.b16 %v26
    %v78 = vunpack.c.l.b16 %v27
    %v79 = vunpack.c.l.b16 %v28
    %v80 = vunpack.c.l.b16 %v29
    %v81 = vunpack.c.l.b16 %v30
    %v82 = vunpack.c.l.b16 %v31
    %v83 = vunpack.c.l.b16 %v32
    %v84 = vunpack.c.l.b16 %v33
    %v85 = vunpack.c.l.b16 %v34
    %v86 = vunpack.c.l.b16 %v35
    %v87 = vpack.c.b16 %v72, %v71
    %v88 = vpack.c.b16 %v74, %v73
    %v89 = vpack.c.b16 %v76, %v75
    %v90 = vpack.c.b16 %v78, %v77
    %v91 = vpack.c.b16 %v80, %v79
    %v92 = vpack.c.b16 %v82, %v81
    %v93 = vpack.c.b16 %v84, %v83
    %v94 = vpack.c.b16 %v86, %v85
    %103 = vmatprep.subr.bf16.mxu0 0
    %104 = vmatpush1.bf16.msra.mxu0 %v87
    %105 = vmatprep.subr.bf16.mxu0 0
    %106 = vmatpush1.bf16.msra.mxu0 %v88
    %107 = vmatprep.subr.bf16.mxu0 0
    %108 = vmatpush1.bf16.msra.mxu0 %v89
    %109 = vmatprep.subr.bf16.mxu0 0
    %110 = vmatpush1.bf16.msra.mxu0 %v90
    %111 = vmatprep.subr.bf16.mxu0 0
    %112 = vmatpush1.bf16.msra.mxu0 %v91
    %113 = vmatprep.subr.bf16.mxu0 0
    %114 = vmatpush1.bf16.msra.mxu0 %v92
    %115 = vmatprep.subr.bf16.mxu0 0
    %116 = vmatpush1.bf16.msra.mxu0 %v93
    %117 = vmatprep.subr.bf16.mxu0 0
    %118 = vmatpush1.bf16.msra.mxu0 %v94
    %119 = vmatprep.subr.bf16.mxu0 0
    %120 = vmatpush1.bf16.msra.mxu0 0
    %121 = vmatprep.subr.bf16.mxu0 0
    %122 = vmatpush1.bf16.msra.mxu0 0
    %123 = vmatprep.subr.bf16.mxu0 0
    %124 = vmatpush1.bf16.msra.mxu0 0
    %125 = vmatprep.subr.bf16.mxu0 0
    %126 = vmatpush1.bf16.msra.mxu0 0
    %127 = vmatprep.subr.bf16.mxu0 0
    %128 = vmatpush1.bf16.msra.mxu0 0
    %129 = vmatprep.subr.bf16.mxu0 0
    %130 = vmatpush1.bf16.msra.mxu0 0
    %131 = vmatprep.subr.bf16.mxu0 0
    %132 = vmatpush1.bf16.msra.mxu0 0
    %133 = vmatprep.subr.bf16.mxu0 0
    %134 = vmatpush1.bf16.msra.mxu0 0
    %135 = vmatprep.mubr.bf16.mxu0 0
    %136 = vmatmul.mubr.bf16.gmra.mrb[0].mxu0 %v51
    %v137 = vpop.f32.mrb[0].mxu0
    %v138 = vadd.f32 %v41, %v137
    %v139 = vpop.f32.mrb[0].mxu0
    %v140 = vpop.f32.mrb[0].mxu0
    %v141 = vadd.f32 %v41, %v140
    %v142 = vpop.f32.mrb[0].mxu0
    %143 = vmatprep.mubr.bf16.mxu0 0
    %144 = vmatmul.mubr.bf16.gmra.mrb[0].mxu0 %v52
    %v145 = vpop.f32.mrb[0].mxu0
    %v146 = vadd.f32 %v41, %v145
    %v147 = vpop.f32.mrb[0].mxu0
    %v148 = vpop.f32.mrb[0].mxu0
    %v149 = vadd.f32 %v41, %v148
    %v150 = vpop.f32.mrb[0].mxu0
    %151 = vdwg.mxu0
    %v152 = vmax.f32 %v138, 0.0
    %v153 = vmax.f32 %v141, 0.0
    %v154 = vmax.f32 %v146, 0.0
    %v155 = vmax.f32 %v149, 0.0
    %v156 = vmul.f32 %v152, %v152
    %v157 = vmul.f32 %v153, %v153
    %v158 = vmul.f32 %v154, %v154
    %v159 = vmul.f32 %v155, %v155
    %160 = vadd.xlane.f32.xlu0 %v156
    %v161 = vpop.xlane.xlu0 %160
    %162 = vadd.xlane.f32.xlu0 %v157
    %v163 = vpop.xlane.xlu0 %162
    %164 = vadd.xlane.f32.xlu0 %v158
    %v165 = vpop.xlane.xlu0 %164
    %166 = vadd.xlane.f32.xlu0 %v159
    %v167 = vpop.xlane.xlu0 %166
    %v168 = vmax.f32 %v161, 1e-24
    %v169 = vmax.f32 %v163, 1e-24
    %v170 = vmax.f32 %v165, 1e-24
    %v171 = vmax.f32 %v167, 1e-24
    %v172 = vrsqrt.pop %v168
    %v173 = vrsqrt.pop %v169
    %v174 = vrsqrt.pop %v170
    %v175 = vrsqrt.pop %v171
    %v176 = vmul.f32 %v152, %v172
    %v177 = vmul.f32 %v153, %v173
    %v178 = vmul.f32 %v154, %v174
    %v179 = vmul.f32 %v155, %v175
    %180 = vst [vmem:[#allocation2] sm:$0xff] %v176
    %181 = vst [vmem:[#allocation2 + $0x8] sm:$0xff] %v177
    %182 = vst [vmem:[#allocation2 + $0x10] sm:$0xff] %v178
    %183 = vst [vmem:[#allocation2 + $0x18] sm:$0xff] %v179
    // Predicated region
    $region14: #{decoder_forward.5} parent=1 // pred_check
      _
    $region15: #{decoder_forward.5} parent=1 // pred_check_branch
      %185 = sbr.rel (0) target = $region17
    $region16: #{decoder_forward.5} parent=1 // pred_region
      %s187 = ssub.s32 512, 512
      %188 = vsyncadd [#allocation3], %s187
      %s189 = sshll.u32 [#allocation2], 4
      %s190 = int_to_ptr.vmem [resolvable:$true] %s189
      %195 = dma.vmem_to_hbm [thread:$0]  %s190, 512, %s3, [#allocation3], 128, 128, 8
    $region17: #{decoder_forward.5} parent=1 // pred_fallthru
      _
    // Predicated region
    $region18: #{decoder_forward.5} parent=1 // pred_check
      _
    $region19: #{decoder_forward.5} parent=1 // pred_check_branch
      %197 = sbr.rel (0) target = $region21
    $region20: #{decoder_forward.5} parent=1 // pred_region
      %198 = dma.done [#allocation3], 512
    $region21: #{decoder_forward.5} parent=1 // pred_fallthru
      _
    %199 = vsyncpa [#allocation3], 1

</llo_original>
